<compile_context>
chip_gen: v7x
topology: tpu7x:2x2x1
jax: 0.10.0
libtpu: 0.0.40
codegen_flags: <defaults>
</compile_context>

<pallas_src>
import jax
import jax.numpy as jnp
from jax.experimental import pallas as pl
from jax.experimental.pallas import tpu as pltpu

_LANE = 128


def _actor_kernel(s_ref,
                  w1_ref, aux1_ref,
                  w2_ref, aux2_ref,
                  w3_ref, b3_ref,
                  o_ref):
    """One independent Actor forward over one [B, S] batch (one grid point)."""
    eps = jnp.float32(1e-5)

    x = s_ref[...]                                   # [B, S]
    inv_b = jnp.float32(1.0 / x.shape[0])            # static batch size
    # NOTE: BN statistics are over the whole batch held by this block. Do NOT
    # batch-tile this kernel without accumulating sum/sum-sq across tiles.

    def linear_relu_bn(h_in, w_ref, aux_ref):
        b = aux_ref[0:1, :]       # bias   [1, H]
        g = aux_ref[1:2, :]       # gamma  [1, H]
        be = aux_ref[2:3, :]      # beta   [1, H]
        h = jnp.dot(h_in, w_ref[...], preferred_element_type=jnp.float32) + b
        h = jnp.maximum(h, 0.0)
        # Single-pass batch stats, BN affine folded into one scale/shift.
        m = jnp.sum(h, axis=0, keepdims=True) * inv_b          # mean
        s2 = jnp.sum(h * h, axis=0, keepdims=True) * inv_b     # E[h^2]
        var = jnp.maximum(s2 - m * m, 0.0)                      # biased var, clamped
        scale = g * jax.lax.rsqrt(var + eps)
        shift = be - m * scale
        return h * scale + shift
        # TODO(synk): at replay-sized B, move the two axis-0 sums onto the MXU
        # (ones[1,B] @ concat([h, h*h], -1)) and consider bf16 matmul inputs;
        # irrelevant while the kernel is launch/DMA-latency bound.

    h = linear_relu_bn(x, w1_ref, aux1_ref)
    h = linear_relu_bn(h, w2_ref, aux2_ref)

    # fc3 weights/bias are pre-padded to a multiple-of-128 output width so the
    # matmul fills a full MXU output tile and the store is unmasked.
    h3 = jnp.dot(h, w3_ref[...], preferred_element_type=jnp.float32) + b3_ref[...]
    o_ref[...] = jnp.tanh(h3)


def _pad_cols(x, cols):
    pad = cols - x.shape[-1]
    if pad == 0:
        return x
    return jnp.pad(x, [(0, 0)] * (x.ndim - 1) + [(0, pad)])


def _resident_spec(arr):
    """Full-array BlockSpec with a constant index_map: stays resident in VMEM."""
    zeros = (0,) * arr.ndim
    return pl.BlockSpec(arr.shape, lambda g: zeros)


@jax.jit
def actor_forward(state, params):
    """Actor forward (training-mode BatchNorm, batch statistics).

    state: [B, state_size] f32 for one batch, or [G, B, state_size] f32 for G
    independent batches (each group gets its own BN statistics; on v7x the G
    axis is sharded across the two TensorCores).
    """
    squeeze_group = state.ndim == 2
    if squeeze_group:
        state = state[None]                          # [1, B, S]
    G, B, S = state.shape

    w1, aux1 = params["w1"], params["aux1"]
    w2, aux2 = params["w2"], params["aux2"]
    w3p, b3p = params["w3p"], params["b3p"]
    H1, H2 = w1.shape[1], w2.shape[1]
    Ap = w3p.shape[1]
    A = params["w3"].shape[1]                        # real action width (static)

    operands = (state, w1, aux1, w2, aux2, w3p, b3p)

    # Advisory cost so XLA can schedule/overlap this custom call.
    flops = G * (2 * B * (S * H1 + H1 * H2 + H2 * Ap) + 10 * B * (H1 + H2))
    transcendentals = G * (B * Ap + H1 + H2)         # tanh + rsqrt
    bytes_accessed = 4 * (G * B * S + S * H1 + 3 * H1 + H1 * H2 + 3 * H2
                          + H2 * Ap + Ap + G * B * Ap)

    in_specs = [
        pl.BlockSpec((None, B, S), lambda g: (g, 0, 0)),   # per-group state
        _resident_spec(w1), _resident_spec(aux1),
        _resident_spec(w2), _resident_spec(aux2),
        _resident_spec(w3p), _resident_spec(b3p),
    ]
    out_specs = pl.BlockSpec((None, B, Ap), lambda g: (g, 0, 0))

    out_padded = pl.pallas_call(
        _actor_kernel,
        grid=(G,),
        in_specs=in_specs,
        out_specs=out_specs,
        out_shape=jax.ShapeDtypeStruct((G, B, Ap), jnp.float32),
        compiler_params=pltpu.CompilerParams(
            dimension_semantics=("parallel",)),
        cost_estimate=pl.CostEstimate(
            flops=flops,
            transcendentals=transcendentals,
            bytes_accessed=bytes_accessed),
    )(*operands)

    out = out_padded[..., :A]
    return out[0] if squeeze_group else out


def init_params(key, state_size, action_size, fc1_units, fc2_units):
    """Deterministic init mirroring Actor.__init__ + reset_parameters.

    hidden_init uses weight.size()[0] == out_features for the limit (quirk of
    the reference code); biases keep PyTorch's default Linear init
    (uniform(+-1/sqrt(in_features))). BN gamma=1, beta=0.

    Kernel operands (aux slabs, lane-padded fc3) are built ONCE here so the
    per-call path does no packing or padding.
    """
    ks = jax.random.split(key, 6)

    lim1 = 1.0 / jnp.sqrt(jnp.float32(fc1_units))
    lim2 = 1.0 / jnp.sqrt(jnp.float32(fc2_units))

    # Weights stored as [in, out].
    w1 = jax.random.uniform(ks[0], (state_size, fc1_units), jnp.float32, -lim1, lim1)
    w2 = jax.random.uniform(ks[1], (fc1_units, fc2_units), jnp.float32, -lim2, lim2)
    w3 = jax.random.uniform(ks[2], (fc2_units, action_size), jnp.float32, -0.003, 0.003)

    bl1 = 1.0 / jnp.sqrt(jnp.float32(state_size))
    bl2 = 1.0 / jnp.sqrt(jnp.float32(fc1_units))
    bl3 = 1.0 / jnp.sqrt(jnp.float32(fc2_units))
    b1 = jax.random.uniform(ks[3], (1, fc1_units), jnp.float32, -bl1, bl1)
    b2 = jax.random.uniform(ks[4], (1, fc2_units), jnp.float32, -bl2, bl2)
    b3 = jax.random.uniform(ks[5], (1, action_size), jnp.float32, -bl3, bl3)

    g1 = jnp.ones((1, fc1_units), jnp.float32)
    be1 = jnp.zeros((1, fc1_units), jnp.float32)
    g2 = jnp.ones((1, fc2_units), jnp.float32)
    be2 = jnp.zeros((1, fc2_units), jnp.float32)

    # Packed per-layer slabs: row 0 = bias, row 1 = gamma, row 2 = beta.
    aux1 = jnp.concatenate([b1, g1, be1], axis=0)    # [3, H1]
    aux2 = jnp.concatenate([b2, g2, be2], axis=0)    # [3, H2]

    # Lane-dense padded fc3 (multiple of 128 output columns), padded once here.
    Ap = max(_LANE, ((action_size + _LANE - 1) // _LANE) * _LANE)
    w3p = _pad_cols(w3, Ap)
    b3p = _pad_cols(b3, Ap)

    return {
        # Kernel operands (packed / padded, built once at init):
        "w1": w1, "aux1": aux1,
        "w2": w2, "aux2": aux2,
        "w3p": w3p, "b3p": b3p,
        # Raw parameters (reference math / checkpointing; w3 also carries the
        # static real action width via its shape):
        "b1": b1, "g1": g1, "be1": be1,
        "b2": b2, "g2": g2, "be2": be2,
        "w3": w3, "b3": b3,
    }


if __name__ == "__main__":
    # B=128 fills the MXU row dimension (128-tall on v5e) while staying small.
    batch = 128
    state_size, action_size = 16, 8
    fc1_units, fc2_units = 128, 128

    key = jax.random.PRNGKey(0)
    k_state, k_state2, k_params = jax.random.split(key, 3)
    params = init_params(k_params, state_size, action_size, fc1_units, fc2_units)

    # Pure-JAX reference of the same math (training-mode BN, biased variance).
    def ref(x, p, eps=1e-5):
        h = jnp.maximum(x @ p["w1"] + p["b1"], 0.0)
        h = (h - h.mean(0, keepdims=True)) / jnp.sqrt(h.var(0, keepdims=True) + eps)
        h = h * p["g1"] + p["be1"]
        h = jnp.maximum(h @ p["w2"] + p["b2"], 0.0)
        h = (h - h.mean(0, keepdims=True)) / jnp.sqrt(h.var(0, keepdims=True) + eps)
        h = h * p["g2"] + p["be2"]
        return jnp.tanh(h @ p["w3"] + p["b3"])

    # --- single-batch path ([B, S]) — matches Actor.forward on a mini-batch ---
    state = jax.random.normal(k_state, (batch, state_size), jnp.float32)
    out = actor_forward(state, params)
    jax.block_until_ready(out)
    assert out.shape == (batch, action_size)
    err = float(jnp.max(jnp.abs(out - ref(state, params))))
    assert jnp.allclose(out, ref(state, params), atol=2e-5, rtol=1e-5), err

    # --- grouped path ([G, B, S]): two independent batches in one pallas_call;
    #     on v7x the two groups are sharded across the two TensorCores -------
    states2 = jnp.stack(
        [state, jax.random.normal(k_state2, (batch, state_size), jnp.float32)])
    out2 = actor_forward(states2, params)
    jax.block_until_ready(out2)
    assert out2.shape == (2, batch, action_size)
    for g in range(2):
        exp_g = ref(states2[g], params)
        err_g = float(jnp.max(jnp.abs(out2[g] - exp_g)))
        assert jnp.allclose(out2[g], exp_g, atol=2e-5, rtol=1e-5), err_g

    print("KERNEL_OK")
</pallas_src>

<mosaic_0001>
module attributes {stable_mosaic.version = 11 : i64} {
  func.func @_actor_kernel(%arg0: i32, %arg1: memref<1x128x16xf32, #tpu.memory_space<vmem>>, %arg2: memref<16x128xf32, #tpu.memory_space<vmem>>, %arg3: memref<3x128xf32, #tpu.memory_space<vmem>>, %arg4: memref<128x128xf32, #tpu.memory_space<vmem>>, %arg5: memref<3x128xf32, #tpu.memory_space<vmem>>, %arg6: memref<128x128xf32, #tpu.memory_space<vmem>>, %arg7: memref<1x128xf32, #tpu.memory_space<vmem>>, %arg8: memref<1x128x128xf32, #tpu.memory_space<vmem>>) attributes {dimension_semantics = [#tpu.dimension_semantics<parallel>], iteration_bounds = array<i64: 1>, scalar_prefetch = 0 : i64, scratch_operands = 0 : i64, tpu.core_type = #tpu.core_type<tc>, window_params = [{transform_indices = @transform_0, window_bounds = array<i64: 1, 128, 16>}, {pipeline_mode = #tpu.pipeline_mode<synchronous>, transform_indices = @transform_1, window_bounds = array<i64: 16, 128>}, {pipeline_mode = #tpu.pipeline_mode<synchronous>, transform_indices = @transform_2, window_bounds = array<i64: 3, 128>}, {pipeline_mode = #tpu.pipeline_mode<synchronous>, transform_indices = @transform_3, window_bounds = array<i64: 128, 128>}, {pipeline_mode = #tpu.pipeline_mode<synchronous>, transform_indices = @transform_4, window_bounds = array<i64: 3, 128>}, {pipeline_mode = #tpu.pipeline_mode<synchronous>, transform_indices = @transform_5, window_bounds = array<i64: 128, 128>}, {pipeline_mode = #tpu.pipeline_mode<synchronous>, transform_indices = @transform_6, window_bounds = array<i64: 1, 128>}, {transform_indices = @transform_7, window_bounds = array<i64: 1, 128, 128>}]} {
    %c0 = arith.constant 0 : index
    %c0_0 = arith.constant 0 : index
    %c0_1 = arith.constant 0 : index
    %0 = vector.load %arg1[%c0, %c0_0, %c0_1] : memref<1x128x16xf32, #tpu.memory_space<vmem>>, vector<1x128x16xf32>
    %1 = vector.shape_cast %0 : vector<1x128x16xf32> to vector<128x16xf32>
    %c0_2 = arith.constant 0 : index
    %c0_3 = arith.constant 0 : index
    %2 = vector.load %arg3[%c0_2, %c0_3] : memref<3x128xf32, #tpu.memory_space<vmem>>, vector<1x128xf32>
    %c1 = arith.constant 1 : index
    %c0_4 = arith.constant 0 : index
    %3 = vector.load %arg3[%c1, %c0_4] : memref<3x128xf32, #tpu.memory_space<vmem>>, vector<1x128xf32>
    %c2 = arith.constant 2 : index
    %c0_5 = arith.constant 0 : index
    %4 = vector.load %arg3[%c2, %c0_5] : memref<3x128xf32, #tpu.memory_space<vmem>>, vector<1x128xf32>
    %c0_6 = arith.constant 0 : index
    %c0_7 = arith.constant 0 : index
    %5 = vector.load %arg2[%c0_6, %c0_7] : memref<16x128xf32, #tpu.memory_space<vmem>>, vector<16x128xf32>
    %cst = arith.constant dense<0.000000e+00> : vector<128x128xf32>
    %6 = tpu.matmul %1, %5, %cst {dimension_numbers = #tpu.dot_dimension_numbers<[1], [0], [0], [1], [0, 0, 1, 1], [], []>} : vector<128x16xf32>, vector<16x128xf32>, vector<128x128xf32> -> vector<128x128xf32>
    %7 = vector.broadcast %2 : vector<1x128xf32> to vector<128x128xf32>
    %8 = arith.addf %6, %7 : vector<128x128xf32>
    %cst_8 = arith.constant 0.000000e+00 : f32
    %9 = vector.broadcast %cst_8 : f32 to vector<128x128xf32>
    %10 = arith.maximumf %8, %9 : vector<128x128xf32>
    %cst_9 = arith.constant dense<0.000000e+00> : vector<128xf32>
    %11 = vector.multi_reduction <add>, %10, %cst_9 [0] : vector<128x128xf32> to vector<128xf32>
    %12 = vector.shape_cast %11 : vector<128xf32> to vector<1x128xf32>
    %cst_10 = arith.constant 7.812500e-03 : f32
    %13 = vector.broadcast %cst_10 : f32 to vector<1x128xf32>
    %14 = arith.mulf %12, %13 : vector<1x128xf32>
    %15 = arith.mulf %10, %10 : vector<128x128xf32>
    %cst_11 = arith.constant dense<0.000000e+00> : vector<128xf32>
    %16 = vector.multi_reduction <add>, %15, %cst_11 [0] : vector<128x128xf32> to vector<128xf32>
    %17 = vector.shape_cast %16 : vector<128xf32> to vector<1x128xf32>
    %cst_12 = arith.constant 7.812500e-03 : f32
    %18 = vector.broadcast %cst_12 : f32 to vector<1x128xf32>
    %19 = arith.mulf %17, %18 : vector<1x128xf32>
    %20 = arith.mulf %14, %14 : vector<1x128xf32>
    %21 = arith.subf %19, %20 : vector<1x128xf32>
    %cst_13 = arith.constant 0.000000e+00 : f32
    %22 = vector.broadcast %cst_13 : f32 to vector<1x128xf32>
    %23 = arith.maximumf %21, %22 : vector<1x128xf32>
    %cst_14 = arith.constant 9.99999974E-6 : f32
    %24 = vector.broadcast %cst_14 : f32 to vector<1x128xf32>
    %25 = arith.addf %23, %24 : vector<1x128xf32>
    %26 = math.rsqrt %25 : vector<1x128xf32>
    %27 = arith.mulf %3, %26 : vector<1x128xf32>
    %28 = arith.mulf %14, %27 : vector<1x128xf32>
    %29 = arith.subf %4, %28 : vector<1x128xf32>
    %30 = vector.broadcast %27 : vector<1x128xf32> to vector<128x128xf32>
    %31 = arith.mulf %10, %30 : vector<128x128xf32>
    %32 = vector.broadcast %29 : vector<1x128xf32> to vector<128x128xf32>
    %33 = arith.addf %31, %32 : vector<128x128xf32>
    %c0_15 = arith.constant 0 : index
    %c0_16 = arith.constant 0 : index
    %34 = vector.load %arg5[%c0_15, %c0_16] : memref<3x128xf32, #tpu.memory_space<vmem>>, vector<1x128xf32>
    %c1_17 = arith.constant 1 : index
    %c0_18 = arith.constant 0 : index
    %35 = vector.load %arg5[%c1_17, %c0_18] : memref<3x128xf32, #tpu.memory_space<vmem>>, vector<1x128xf32>
    %c2_19 = arith.constant 2 : index
    %c0_20 = arith.constant 0 : index
    %36 = vector.load %arg5[%c2_19, %c0_20] : memref<3x128xf32, #tpu.memory_space<vmem>>, vector<1x128xf32>
    %c0_21 = arith.constant 0 : index
    %c0_22 = arith.constant 0 : index
    %37 = vector.load %arg4[%c0_21, %c0_22] : memref<128x128xf32, #tpu.memory_space<vmem>>, vector<128x128xf32>
    %cst_23 = arith.constant dense<0.000000e+00> : vector<128x128xf32>
    %38 = tpu.matmul %33, %37, %cst_23 {dimension_numbers = #tpu.dot_dimension_numbers<[1], [0], [0], [1], [0, 0, 1, 1], [], []>} : vector<128x128xf32>, vector<128x128xf32>, vector<128x128xf32> -> vector<128x128xf32>
    %39 = vector.broadcast %34 : vector<1x128xf32> to vector<128x128xf32>
    %40 = arith.addf %38, %39 : vector<128x128xf32>
    %cst_24 = arith.constant 0.000000e+00 : f32
    %41 = vector.broadcast %cst_24 : f32 to vector<128x128xf32>
    %42 = arith.maximumf %40, %41 : vector<128x128xf32>
    %cst_25 = arith.constant dense<0.000000e+00> : vector<128xf32>
    %43 = vector.multi_reduction <add>, %42, %cst_25 [0] : vector<128x128xf32> to vector<128xf32>
    %44 = vector.shape_cast %43 : vector<128xf32> to vector<1x128xf32>
    %cst_26 = arith.constant 7.812500e-03 : f32
    %45 = vector.broadcast %cst_26 : f32 to vector<1x128xf32>
    %46 = arith.mulf %44, %45 : vector<1x128xf32>
    %47 = arith.mulf %42, %42 : vector<128x128xf32>
    %cst_27 = arith.constant dense<0.000000e+00> : vector<128xf32>
    %48 = vector.multi_reduction <add>, %47, %cst_27 [0] : vector<128x128xf32> to vector<128xf32>
    %49 = vector.shape_cast %48 : vector<128xf32> to vector<1x128xf32>
    %cst_28 = arith.constant 7.812500e-03 : f32
    %50 = vector.broadcast %cst_28 : f32 to vector<1x128xf32>
    %51 = arith.mulf %49, %50 : vector<1x128xf32>
    %52 = arith.mulf %46, %46 : vector<1x128xf32>
    %53 = arith.subf %51, %52 : vector<1x128xf32>
    %cst_29 = arith.constant 0.000000e+00 : f32
    %54 = vector.broadcast %cst_29 : f32 to vector<1x128xf32>
    %55 = arith.maximumf %53, %54 : vector<1x128xf32>
    %cst_30 = arith.constant 9.99999974E-6 : f32
    %56 = vector.broadcast %cst_30 : f32 to vector<1x128xf32>
    %57 = arith.addf %55, %56 : vector<1x128xf32>
    %58 = math.rsqrt %57 : vector<1x128xf32>
    %59 = arith.mulf %35, %58 : vector<1x128xf32>
    %60 = arith.mulf %46, %59 : vector<1x128xf32>
    %61 = arith.subf %36, %60 : vector<1x128xf32>
    %62 = vector.broadcast %59 : vector<1x128xf32> to vector<128x128xf32>
    %63 = arith.mulf %42, %62 : vector<128x128xf32>
    %64 = vector.broadcast %61 : vector<1x128xf32> to vector<128x128xf32>
    %65 = arith.addf %63, %64 : vector<128x128xf32>
    %c0_31 = arith.constant 0 : index
    %c0_32 = arith.constant 0 : index
    %66 = vector.load %arg6[%c0_31, %c0_32] : memref<128x128xf32, #tpu.memory_space<vmem>>, vector<128x128xf32>
    %cst_33 = arith.constant dense<0.000000e+00> : vector<128x128xf32>
    %67 = tpu.matmul %65, %66, %cst_33 {dimension_numbers = #tpu.dot_dimension_numbers<[1], [0], [0], [1], [0, 0, 1, 1], [], []>} : vector<128x128xf32>, vector<128x128xf32>, vector<128x128xf32> -> vector<128x128xf32>
    %c0_34 = arith.constant 0 : index
    %c0_35 = arith.constant 0 : index
    %68 = vector.load %arg7[%c0_34, %c0_35] : memref<1x128xf32, #tpu.memory_space<vmem>>, vector<1x128xf32>
    %69 = vector.broadcast %68 : vector<1x128xf32> to vector<128x128xf32>
    %70 = arith.addf %67, %69 : vector<128x128xf32>
    %71 = math.tanh %70 : vector<128x128xf32>
    %c0_36 = arith.constant 0 : index
    %c0_37 = arith.constant 0 : index
    %c0_38 = arith.constant 0 : index
    %72 = vector.load %arg8[%c0_36, %c0_37, %c0_38] : memref<1x128x128xf32, #tpu.memory_space<vmem>>, vector<1x128x128xf32>
    %73 = vector.shape_cast %72 : vector<1x128x128xf32> to vector<128x128xf32>
    %74 = vector.shape_cast %71 : vector<128x128xf32> to vector<1x128x128xf32>
    tpu.vector_store %arg8[%c0_36, %c0_37, %c0_38], %74 {strides = array<i32>} : memref<1x128x128xf32, #tpu.memory_space<vmem>>, vector<1x128x128xf32>,
    return
  }
  func.func @transform_0(%arg0: i32) -> (i32, i32, i32) {
    %c0_i32 = arith.constant 0 : i32
    %c0_i32_0 = arith.constant 0 : i32
    %c0_i32_1 = arith.constant 0 : i32
    return %arg0, %c0_i32, %c0_i32_0 : i32, i32, i32
  }
  func.func @transform_1(%arg0: i32) -> (i32, i32) {
    %c0_i32 = arith.constant 0 : i32
    %c0_i32_0 = arith.constant 0 : i32
    %c0_i32_1 = arith.constant 0 : i32
    return %c0_i32, %c0_i32_0 : i32, i32
  }
  func.func @transform_2(%arg0: i32) -> (i32, i32) {
    %c0_i32 = arith.constant 0 : i32
    %c0_i32_0 = arith.constant 0 : i32
    %c0_i32_1 = arith.constant 0 : i32
    return %c0_i32, %c0_i32_0 : i32, i32
  }
  func.func @transform_3(%arg0: i32) -> (i32, i32) {
    %c0_i32 = arith.constant 0 : i32
    %c0_i32_0 = arith.constant 0 : i32
    %c0_i32_1 = arith.constant 0 : i32
    return %c0_i32, %c0_i32_0 : i32, i32
  }
  func.func @transform_4(%arg0: i32) -> (i32, i32) {
    %c0_i32 = arith.constant 0 : i32
    %c0_i32_0 = arith.constant 0 : i32
    %c0_i32_1 = arith.constant 0 : i32
    return %c0_i32, %c0_i32_0 : i32, i32
  }
  func.func @transform_5(%arg0: i32) -> (i32, i32) {
    %c0_i32 = arith.constant 0 : i32
    %c0_i32_0 = arith.constant 0 : i32
    %c0_i32_1 = arith.constant 0 : i32
    return %c0_i32, %c0_i32_0 : i32, i32
  }
  func.func @transform_6(%arg0: i32) -> (i32, i32) {
    %c0_i32 = arith.constant 0 : i32
    %c0_i32_0 = arith.constant 0 : i32
    %c0_i32_1 = arith.constant 0 : i32
    return %c0_i32, %c0_i32_0 : i32, i32
  }
  func.func @transform_7(%arg0: i32) -> (i32, i32, i32) {
    %c0_i32 = arith.constant 0 : i32
    %c0_i32_0 = arith.constant 0 : i32
    %c0_i32_1 = arith.constant 0 : i32
    return %arg0, %c0_i32, %c0_i32_0 : i32, i32, i32
  }
}

</mosaic_0001>

<llo_original>
// kernel: actor_forward.1
$region0: #{actor_forward.1}
  #allocation0 [shape = 'u32[]', space=smem, size = 0x4, offset = 0x4, fixed_abs, tag = 'smem constant byte address 0x4 - core index']
  #allocation1 [shape = 'u32[144,128]{1,0:T(1,128)}', space=vmem, size = 0x12000, scoped, tag = 'internal scratch']
  %s0 = inlined_call_operand.vmem [shape: f32[1,128,16], index: 0, kind: input, shape index: {}]
  %s1 = inlined_call_operand.vmem [shape: f32[16,128], index: 1, kind: input, shape index: {}]
  %s2 = inlined_call_operand.vmem [shape: f32[3,128], index: 2, kind: input, shape index: {}]
  %s3 = inlined_call_operand.vmem [shape: f32[128,128], index: 3, kind: input, shape index: {}]
  %s4 = inlined_call_operand.vmem [shape: f32[3,128], index: 4, kind: input, shape index: {}]
  %s5 = inlined_call_operand.hbm [shape: f32[128,128], index: 5, kind: input, shape index: {}]
  %s6 = inlined_call_operand.vmem [shape: f32[1,128], index: 6, kind: input, shape index: {}]
  %s7 = inlined_call_operand.vmem [shape: f32[1,128,128], index: 7, kind: output, shape index: {}]
  %s8 = sld [smem:[#allocation0]]
  $region42: #{actor_forward.1} parent=0
    _
  %s10 = ssub.s32 1, %s8
  %s11 = scalar_select 0, %s10, %s8
  $region1: #{actor_forward.1} parent=0
    #allocation2 [shape = 'u8[65536]{0}', space=vmem, size = 0x10000, scoped, tag = 'input window, operand 5, single buffered']
    #allocation3 [shape = 's32[1]{0}', space=sflag, size = 0x4, scoped, tag = 'scoped memory for actor_forward.1']
    %12 = vsyncpa [#allocation3], 0
    // Predicated region
    $region2: #{actor_forward.1} parent=1 // pred_check
      _
    $region3: #{actor_forward.1} parent=1 // pred_check_branch
      %14 = sbr.rel (0) target = $region5
    $region4: #{actor_forward.1} parent=1 // pred_region
      _
    $region5: #{actor_forward.1} parent=1 // pred_fallthru
      _
    // Predicated region
    $region6: #{actor_forward.1} parent=1 // pred_check
      _
    $region7: #{actor_forward.1} parent=1 // pred_check_branch
      %16 = sbr.rel (0) target = $region9
    $region8: #{actor_forward.1} parent=1 // pred_region
      _
    $region9: #{actor_forward.1} parent=1 // pred_fallthru
      _
    // Predicated region
    $region10: #{actor_forward.1} parent=1 // pred_check
      _
    $region11: #{actor_forward.1} parent=1 // pred_check_branch
      %18 = sbr.rel (0) target = $region13
    $region12: #{actor_forward.1} parent=1 // pred_region
      _
    $region13: #{actor_forward.1} parent=1 // pred_fallthru
      _
    // Predicated region
    $region14: #{actor_forward.1} parent=1 // pred_check
      _
    $region15: #{actor_forward.1} parent=1 // pred_check_branch
      %20 = sbr.rel (0) target = $region17
    $region16: #{actor_forward.1} parent=1 // pred_region
      _
    $region17: #{actor_forward.1} parent=1 // pred_fallthru
      _
    // Predicated region
    $region18: #{actor_forward.1} parent=1 // pred_check
      _
    $region19: #{actor_forward.1} parent=1 // pred_check_branch
      %22 = sbr.rel (0) target = $region21
    $region20: #{actor_forward.1} parent=1 // pred_region
      _
    $region21: #{actor_forward.1} parent=1 // pred_fallthru
      _
    // Predicated region
    $region22: #{actor_forward.1} parent=1 // pred_check
      _
    $region23: #{actor_forward.1} parent=1 // pred_check_branch
      %24 = sbr.rel (0) target = $region25
    $region24: #{actor_forward.1} parent=1 // pred_region
      %s26 = ssub.s32 2048, 2048
      %27 = vsyncadd [#allocation3], %s26
      %s28 = sshll.u32 [#allocation2], 4
      %s29 = int_to_ptr.vmem [resolvable:$true] %s28
      %34 = dma.hbm_to_vmem [thread:$0]  %s5, 2048, %s29, [#allocation3], 128, 128, 8
    $region25: #{actor_forward.1} parent=1 // pred_fallthru
      _
    // Predicated region
    $region26: #{actor_forward.1} parent=1 // pred_check
      _
    $region27: #{actor_forward.1} parent=1 // pred_check_branch
      %36 = sbr.rel (0) target = $region29
    $region28: #{actor_forward.1} parent=1 // pred_region
      _
    $region29: #{actor_forward.1} parent=1 // pred_fallthru
      _
    // Predicated region
    $region30: #{actor_forward.1} parent=1 // pred_check
      _
    $region31: #{actor_forward.1} parent=1 // pred_check_branch
      %38 = sbr.rel (0) target = $region33
    $region32: #{actor_forward.1} parent=1 // pred_region
      %39 = dma.done [#allocation3], 2048
    $region33: #{actor_forward.1} parent=1 // pred_fallthru
      _
    %v40 = vld [vmem:[%s0] sm:$0xff]
    %v41 = vld [vmem:[%s0 + $0x8] sm:$0xff]
    %v42 = vld [vmem:[%s0 + $0x10] sm:$0xff]
    %v43 = vld [vmem:[%s0 + $0x18] sm:$0xff]
    %v44 = vld [vmem:[%s0 + $0x20] sm:$0xff]
    %v45 = vld [vmem:[%s0 + $0x28] sm:$0xff]
    %v46 = vld [vmem:[%s0 + $0x30] sm:$0xff]
    %v47 = vld [vmem:[%s0 + $0x38] sm:$0xff]
    %v48 = vld [vmem:[%s0 + $0x40] sm:$0xff]
    %v49 = vld [vmem:[%s0 + $0x48] sm:$0xff]
    %v50 = vld [vmem:[%s0 + $0x50] sm:$0xff]
    %v51 = vld [vmem:[%s0 + $0x58] sm:$0xff]
    %v52 = vld [vmem:[%s0 + $0x60] sm:$0xff]
    %v53 = vld [vmem:[%s0 + $0x68] sm:$0xff]
    %v54 = vld [vmem:[%s0 + $0x70] sm:$0xff]
    %v55 = vld [vmem:[%s0 + $0x78] sm:$0xff]
    %v56 = vld [vmem:[%s2] sm:$0x1]
    %v57 = vld [vmem:[%s2 + $0x1] sm:$0x1]
    %v58 = vld [vmem:[%s2 + $0x2] sm:$0x1]
    %v59 = vld [vmem:[%s1] sm:$0xff]
    %v60 = vld [vmem:[%s1 + $0x8] sm:$0xff]
    %v61 = vlaneseq
    %v62 = vshrl.u32 %v61, 7
    %v63 = vsub.s32 0, %v62
    %v64 = vrot.slane %v56, %v63
    %vm65 = vcmask 130048
    %v67 = vsel %vm65, %v40, 0
    %v70 = vsel %vm65, %v41, 0
    %v73 = vsel %vm65, %v42, 0
    %v76 = vsel %vm65, %v43, 0
    %v79 = vsel %vm65, %v44, 0
    %v82 = vsel %vm65, %v45, 0
    %v85 = vsel %vm65, %v46, 0
    %v88 = vsel %vm65, %v47, 0
    %v91 = vsel %vm65, %v48, 0
    %v94 = vsel %vm65, %v49, 0
    %v97 = vsel %vm65, %v50, 0
    %v100 = vsel %vm65, %v51, 0
    %v103 = vsel %vm65, %v52, 0
    %v106 = vsel %vm65, %v53, 0
    %v109 = vsel %vm65, %v54, 0
    %v112 = vsel %vm65, %v55, 0
    %114 = vmatprep.subr.mxu0 0.0
    %115 = vmatpush1.msra.mxu0 %v59
    %116 = vmatprep.subr.mxu0 0.0
    %117 = vmatpush1.msra.mxu0 %v60
    %118 = vmatprep.subr.mxu0 0.0
    %119 = vmatpush1.msra.mxu0 0.0
    %120 = vmatprep.subr.mxu0 0.0
    %121 = vmatpush1.msra.mxu0 0.0
    %122 = vmatprep.subr.mxu0 0.0
    %123 = vmatpush1.msra.mxu0 0.0
    %124 = vmatprep.subr.mxu0 0.0
    %125 = vmatpush1.msra.mxu0 0.0
    %126 = vmatprep.subr.mxu0 0.0
    %127 = vmatpush1.msra.mxu0 0.0
    %128 = vmatprep.subr.mxu0 0.0
    %129 = vmatpush1.msra.mxu0 0.0
    %130 = vmatprep.subr.mxu0 0.0
    %131 = vmatpush1.msra.mxu0 0.0
    %132 = vmatprep.subr.mxu0 0.0
    %133 = vmatpush1.msra.mxu0 0.0
    %134 = vmatprep.subr.mxu0 0.0
    %135 = vmatpush1.msra.mxu0 0.0
    %136 = vmatprep.subr.mxu0 0.0
    %137 = vmatpush1.msra.mxu0 0.0
    %138 = vmatprep.subr.mxu0 0.0
    %139 = vmatpush1.msra.mxu0 0.0
    %140 = vmatprep.subr.mxu0 0.0
    %141 = vmatpush1.msra.mxu0 0.0
    %142 = vmatprep.subr.mxu0 0.0
    %143 = vmatpush1.msra.mxu0 0.0
    %144 = vmatprep.subr.mxu0 0.0
    %145 = vmatpush1.msra.mxu0 0.0
    %146 = vmatprep.subr.mxu0 0.0
    %147 = vmatpush1.msra.mxu0 0.0
    %148 = vmatprep.subr.mxu0 0.0
    %149 = vmatpush1.msra.mxu0 0.0
    %150 = vmatprep.subr.mxu0 0.0
    %151 = vmatpush1.msra.mxu0 0.0
    %152 = vmatprep.subr.mxu0 0.0
    %153 = vmatpush1.msra.mxu0 0.0
    %154 = vmatprep.subr.mxu0 0.0
    %155 = vmatpush1.msra.mxu0 0.0
    %156 = vmatprep.subr.mxu0 0.0
    %157 = vmatpush1.msra.mxu0 0.0
    %158 = vmatprep.subr.mxu0 0.0
    %159 = vmatpush1.msra.mxu0 0.0
    %160 = vmatprep.subr.mxu0 0.0
    %161 = vmatpush1.msra.mxu0 0.0
    %162 = vmatprep.subr.mxu0 0.0
    %163 = vmatpush1.msra.mxu0 0.0
    %164 = vmatprep.subr.mxu0 0.0
    %165 = vmatpush1.msra.mxu0 0.0
    %166 = vmatprep.subr.mxu0 0.0
    %167 = vmatpush1.msra.mxu0 0.0
    %168 = vmatprep.subr.mxu0 0.0
    %169 = vmatpush1.msra.mxu0 0.0
    %170 = vmatprep.subr.mxu0 0.0
    %171 = vmatpush1.msra.mxu0 0.0
    %172 = vmatprep.subr.mxu0 0.0
    %173 = vmatpush1.msra.mxu0 0.0
    %174 = vmatprep.subr.mxu0 0.0
    %175 = vmatpush1.msra.mxu0 0.0
    %176 = vmatprep.subr.mxu0 0.0
    %177 = vmatpush1.msra.mxu0 0.0
    %178 = vmatprep.mubr.f32.mxu0 0.0
    %179 = vmatmul.mubr.f32.gmra.mrb[0].mxu0 %v67
    %v180 = vpop.f32.mrb[0].mxu0
    %v181 = vadd.f32 %v64, %v180
    %v182 = vpop.f32.mrb[0].mxu0
    %183 = vmatprep.mubr.f32.mxu0 0.0
    %184 = vmatmul.mubr.f32.gmra.mrb[0].mxu0 %v70
    %v185 = vpop.f32.mrb[0].mxu0
    %v186 = vadd.f32 %v64, %v185
    %v187 = vpop.f32.mrb[0].mxu0
    %188 = vmatprep.mubr.f32.mxu0 0.0
    %189 = vmatmul.mubr.f32.gmra.mrb[0].mxu0 %v73
    %v190 = vpop.f32.mrb[0].mxu0
    %v191 = vadd.f32 %v64, %v190
    %v192 = vpop.f32.mrb[0].mxu0
    %193 = vmatprep.mubr.f32.mxu0 0.0
    %194 = vmatmul.mubr.f32.gmra.mrb[0].mxu0 %v76
    %v195 = vpop.f32.mrb[0].mxu0
    %v196 = vadd.f32 %v64, %v195
    %v197 = vpop.f32.mrb[0].mxu0
    %198 = vmatprep.mubr.f32.mxu0 0.0
    %199 = vmatmul.mubr.f32.gmra.mrb[0].mxu0 %v79
    %v200 = vpop.f32.mrb[0].mxu0
    %v201 = vadd.f32 %v64, %v200
    %v202 = vpop.f32.mrb[0].mxu0
    %203 = vmatprep.mubr.f32.mxu0 0.0
    %204 = vmatmul.mubr.f32.gmra.mrb[0].mxu0 %v82
    %v205 = vpop.f32.mrb[0].mxu0
    %v206 = vadd.f32 %v64, %v205
    %v207 = vpop.f32.mrb[0].mxu0
    %208 = vmatprep.mubr.f32.mxu0 0.0
    %209 = vmatmul.mubr.f32.gmra.mrb[0].mxu0 %v85
    %v210 = vpop.f32.mrb[0].mxu0
    %v211 = vadd.f32 %v64, %v210
    %v212 = vpop.f32.mrb[0].mxu0
    %213 = vmatprep.mubr.f32.mxu0 0.0
    %214 = vmatmul.mubr.f32.gmra.mrb[0].mxu0 %v88
    %v215 = vpop.f32.mrb[0].mxu0
    %v216 = vadd.f32 %v64, %v215
    %v217 = vpop.f32.mrb[0].mxu0
    %218 = vmatprep.mubr.f32.mxu0 0.0
    %219 = vmatmul.mubr.f32.gmra.mrb[0].mxu0 %v91
    %v220 = vpop.f32.mrb[0].mxu0
    %v221 = vadd.f32 %v64, %v220
    %v222 = vpop.f32.mrb[0].mxu0
    %223 = vmatprep.mubr.f32.mxu0 0.0
    %224 = vmatmul.mubr.f32.gmra.mrb[0].mxu0 %v94
    %v225 = vpop.f32.mrb[0].mxu0
    %v226 = vadd.f32 %v64, %v225
    %v227 = vpop.f32.mrb[0].mxu0
    %228 = vmatprep.mubr.f32.mxu0 0.0
    %229 = vmatmul.mubr.f32.gmra.mrb[0].mxu0 %v97
    %v230 = vpop.f32.mrb[0].mxu0
    %v231 = vadd.f32 %v64, %v230
    %v232 = vpop.f32.mrb[0].mxu0
    %233 = vmatprep.mubr.f32.mxu0 0.0
    %234 = vmatmul.mubr.f32.gmra.mrb[0].mxu0 %v100
    %v235 = vpop.f32.mrb[0].mxu0
    %v236 = vadd.f32 %v64, %v235
    %v237 = vpop.f32.mrb[0].mxu0
    %238 = vmatprep.mubr.f32.mxu0 0.0
    %239 = vmatmul.mubr.f32.gmra.mrb[0].mxu0 %v103
    %v240 = vpop.f32.mrb[0].mxu0
    %v241 = vadd.f32 %v64, %v240
    %v242 = vpop.f32.mrb[0].mxu0
    %243 = vmatprep.mubr.f32.mxu0 0.0
    %244 = vmatmul.mubr.f32.gmra.mrb[0].mxu0 %v106
    %v245 = vpop.f32.mrb[0].mxu0
    %v246 = vadd.f32 %v64, %v245
    %v247 = vpop.f32.mrb[0].mxu0
    %248 = vmatprep.mubr.f32.mxu0 0.0
    %249 = vmatmul.mubr.f32.gmra.mrb[0].mxu0 %v109
    %v250 = vpop.f32.mrb[0].mxu0
    %v251 = vadd.f32 %v64, %v250
    %v252 = vpop.f32.mrb[0].mxu0
    %253 = vmatprep.mubr.f32.mxu0 0.0
    %254 = vmatmul.mubr.f32.gmra.mrb[0].mxu0 %v112
    %v255 = vpop.f32.mrb[0].mxu0
    %v256 = vadd.f32 %v64, %v255
    %v257 = vpop.f32.mrb[0].mxu0
    %258 = vdwg.mxu0
    %v259 = vmax.f32 %v181, 0.0
    %v260 = vmax.f32 %v186, 0.0
    %v261 = vmax.f32 %v191, 0.0
    %v262 = vmax.f32 %v196, 0.0
    %v263 = vmax.f32 %v201, 0.0
    %v264 = vmax.f32 %v206, 0.0
    %v265 = vmax.f32 %v211, 0.0
    %v266 = vmax.f32 %v216, 0.0
    %v267 = vmax.f32 %v221, 0.0
    %v268 = vmax.f32 %v226, 0.0
    %v269 = vmax.f32 %v231, 0.0
    %v270 = vmax.f32 %v236, 0.0
    %v271 = vmax.f32 %v241, 0.0
    %v272 = vmax.f32 %v246, 0.0
    %v273 = vmax.f32 %v251, 0.0
    %v274 = vmax.f32 %v256, 0.0
    %v275 = vadd.f32 %v259, %v260
    %v276 = vadd.f32 %v275, %v261
    %v277 = vadd.f32 %v276, %v262
    %v278 = vadd.f32 %v277, %v263
    %v279 = vadd.f32 %v278, %v264
    %v280 = vadd.f32 %v279, %v265
    %v281 = vadd.f32 %v280, %v266
    %v282 = vadd.f32 %v281, %v267
    %v283 = vadd.f32 %v282, %v268
    %v284 = vadd.f32 %v283, %v269
    %v285 = vadd.f32 %v284, %v270
    %v286 = vadd.f32 %v285, %v271
    %v287 = vadd.f32 %v286, %v272
    %v288 = vadd.f32 %v287, %v273
    %v289 = vadd.f32 %v288, %v274
    %v290 = vrot.slane %v289, 4
    %v291 = vadd.f32 %v289, %v290
    %v292 = vrot.slane %v291, 2
    %v293 = vadd.f32 %v291, %v292
    %v294 = vrot.slane %v293, 1
    %v295 = vadd.f32 %v293, %v294
    %v296 = vmul.f32 %v295, 0.0078125
    %v297 = vmul.f32 %v259, %v259
    %v298 = vmul.f32 %v260, %v260
    %v299 = vmul.f32 %v261, %v261
    %v300 = vmul.f32 %v262, %v262
    %v301 = vmul.f32 %v263, %v263
    %v302 = vmul.f32 %v264, %v264
    %v303 = vmul.f32 %v265, %v265
    %v304 = vmul.f32 %v266, %v266
    %v305 = vmul.f32 %v267, %v267
    %v306 = vmul.f32 %v268, %v268
    %v307 = vmul.f32 %v269, %v269
    %v308 = vmul.f32 %v270, %v270
    %v309 = vmul.f32 %v271, %v271
    %v310 = vmul.f32 %v272, %v272
    %v311 = vmul.f32 %v273, %v273
    %v312 = vmul.f32 %v274, %v274
    %v313 = vadd.f32 %v297, %v298
    %v314 = vadd.f32 %v313, %v299
    %v315 = vadd.f32 %v314, %v300
    %v316 = vadd.f32 %v315, %v301
    %v317 = vadd.f32 %v316, %v302
    %v318 = vadd.f32 %v317, %v303
    %v319 = vadd.f32 %v318, %v304
    %v320 = vadd.f32 %v319, %v305
    %v321 = vadd.f32 %v320, %v306
    %v322 = vadd.f32 %v321, %v307
    %v323 = vadd.f32 %v322, %v308
    %v324 = vadd.f32 %v323, %v309
    %v325 = vadd.f32 %v324, %v310
    %v326 = vadd.f32 %v325, %v311
    %v327 = vadd.f32 %v326, %v312
    %v328 = vrot.slane %v327, 4
    %v329 = vadd.f32 %v327, %v328
    %v330 = vrot.slane %v329, 2
    %v331 = vadd.f32 %v329, %v330
    %v332 = vrot.slane %v331, 1
    %v333 = vadd.f32 %v331, %v332
    %v334 = vmul.f32 %v333, 0.0078125
    %v335 = vmul.f32 %v296, %v296
    %v336 = vsub.f32 %v334, %v335
    %v337 = vmax.f32 %v336, 0.0
    %v338 = vadd.f32 %v337, 1e-05
    %v339 = vrsqrt.pop %v338
    %v340 = vmul.f32 %v57, %v339
    %v341 = vmul.f32 %v296, %v340
    %v342 = vsub.f32 %v58, %v341
    %v343 = vlaneseq
    %v344 = vshrl.u32 %v343, 7
    %v345 = vsub.s32 0, %v344
    %v346 = vrot.slane %v340, %v345
    %v347 = vmul.f32 %v259, %v346
    %v348 = vmul.f32 %v260, %v346
    %v349 = vmul.f32 %v261, %v346
    %v350 = vmul.f32 %v262, %v346
    %v351 = vmul.f32 %v263, %v346
    %v352 = vmul.f32 %v264, %v346
    %v353 = vmul.f32 %v265, %v346
    %v354 = vmul.f32 %v266, %v346
    %v355 = vmul.f32 %v267, %v346
    %v356 = vmul.f32 %v268, %v346
    %v357 = vmul.f32 %v269, %v346
    %v358 = vmul.f32 %v270, %v346
    %v359 = vmul.f32 %v271, %v346
    %v360 = vmul.f32 %v272, %v346
    %v361 = vmul.f32 %v273, %v346
    %v362 = vmul.f32 %v274, %v346
    %v363 = vlaneseq
    %v364 = vshrl.u32 %v363, 7
    %v365 = vsub.s32 0, %v364
    %v366 = vrot.slane %v342, %v365
    %v367 = vadd.f32 %v347, %v366
    %v368 = vadd.f32 %v348, %v366
    %v369 = vadd.f32 %v349, %v366
    %v370 = vadd.f32 %v350, %v366
    %v371 = vadd.f32 %v351, %v366
    %v372 = vadd.f32 %v352, %v366
    %v373 = vadd.f32 %v353, %v366
    %v374 = vadd.f32 %v354, %v366
    %v375 = vadd.f32 %v355, %v366
    %v376 = vadd.f32 %v356, %v366
    %v377 = vadd.f32 %v357, %v366
    %v378 = vadd.f32 %v358, %v366
    %v379 = vadd.f32 %v359, %v366
    %v380 = vadd.f32 %v360, %v366
    %v381 = vadd.f32 %v361, %v366
    %v382 = vadd.f32 %v362, %v366
    %v383 = vld [vmem:[%s4] sm:$0x1]
    %v384 = vld [vmem:[%s4 + $0x1] sm:$0x1]
    %v385 = vld [vmem:[%s4 + $0x2] sm:$0x1]
    %v386 = vld [vmem:[%s3] sm:$0xff]
    %v387 = vld [vmem:[%s3 + $0x8] sm:$0xff]
    %v388 = vld [vmem:[%s3 + $0x10] sm:$0xff]
    %v389 = vld [vmem:[%s3 + $0x18] sm:$0xff]
    %v390 = vld [vmem:[%s3 + $0x20] sm:$0xff]
    %v391 = vld [vmem:[%s3 + $0x28] sm:$0xff]
    %v392 = vld [vmem:[%s3 + $0x30] sm:$0xff]
    %v393 = vld [vmem:[%s3 + $0x38] sm:$0xff]
    %v394 = vld [vmem:[%s3 + $0x40] sm:$0xff]
    %v395 = vld [vmem:[%s3 + $0x48] sm:$0xff]
    %v396 = vld [vmem:[%s3 + $0x50] sm:$0xff]
    %v397 = vld [vmem:[%s3 + $0x58] sm:$0xff]
    %v398 = vld [vmem:[%s3 + $0x60] sm:$0xff]
    %v399 = vld [vmem:[%s3 + $0x68] sm:$0xff]
    %v400 = vld [vmem:[%s3 + $0x70] sm:$0xff]
    %v401 = vld [vmem:[%s3 + $0x78] sm:$0xff]
    %v402 = vlaneseq
    %v403 = vshrl.u32 %v402, 7
    %v404 = vsub.s32 0, %v403
    %v405 = vrot.slane %v383, %v404
    %406 = vmatprep.subr.mxu0 0.0
    %407 = vmatpush1.msra.mxu0 %v386
    %408 = vmatprep.subr.mxu0 0.0
    %409 = vmatpush1.msra.mxu0 %v387
    %410 = vmatprep.subr.mxu0 0.0
    %411 = vmatpush1.msra.mxu0 %v388
    %412 = vmatprep.subr.mxu0 0.0
    %413 = vmatpush1.msra.mxu0 %v389
    %414 = vmatprep.subr.mxu0 0.0
    %415 = vmatpush1.msra.mxu0 %v390
    %416 = vmatprep.subr.mxu0 0.0
    %417 = vmatpush1.msra.mxu0 %v391
    %418 = vmatprep.subr.mxu0 0.0
    %419 = vmatpush1.msra.mxu0 %v392
    %420 = vmatprep.subr.mxu0 0.0
    %421 = vmatpush1.msra.mxu0 %v393
    %422 = vmatprep.subr.mxu0 0.0
    %423 = vmatpush1.msra.mxu0 %v394
    %424 = vmatprep.subr.mxu0 0.0
    %425 = vmatpush1.msra.mxu0 %v395
    %426 = vmatprep.subr.mxu0 0.0
    %427 = vmatpush1.msra.mxu0 %v396
    %428 = vmatprep.subr.mxu0 0.0
    %429 = vmatpush1.msra.mxu0 %v397
    %430 = vmatprep.subr.mxu0 0.0
    %431 = vmatpush1.msra.mxu0 %v398
    %432 = vmatprep.subr.mxu0 0.0
    %433 = vmatpush1.msra.mxu0 %v399
    %434 = vmatprep.subr.mxu0 0.0
    %435 = vmatpush1.msra.mxu0 %v400
    %436 = vmatprep.subr.mxu0 0.0
    %437 = vmatpush1.msra.mxu0 %v401
    %438 = vmatprep.subr.mxu0 0.0
    %439 = vmatpush1.msra.mxu0 0.0
    %440 = vmatprep.subr.mxu0 0.0
    %441 = vmatpush1.msra.mxu0 0.0
    %442 = vmatprep.subr.mxu0 0.0
    %443 = vmatpush1.msra.mxu0 0.0
    %444 = vmatprep.subr.mxu0 0.0
    %445 = vmatpush1.msra.mxu0 0.0
    %446 = vmatprep.subr.mxu0 0.0
    %447 = vmatpush1.msra.mxu0 0.0
    %448 = vmatprep.subr.mxu0 0.0
    %449 = vmatpush1.msra.mxu0 0.0
    %450 = vmatprep.subr.mxu0 0.0
    %451 = vmatpush1.msra.mxu0 0.0
    %452 = vmatprep.subr.mxu0 0.0
    %453 = vmatpush1.msra.mxu0 0.0
    %454 = vmatprep.subr.mxu0 0.0
    %455 = vmatpush1.msra.mxu0 0.0
    %456 = vmatprep.subr.mxu0 0.0
    %457 = vmatpush1.msra.mxu0 0.0
    %458 = vmatprep.subr.mxu0 0.0
    %459 = vmatpush1.msra.mxu0 0.0
    %460 = vmatprep.subr.mxu0 0.0
    %461 = vmatpush1.msra.mxu0 0.0
    %462 = vmatprep.subr.mxu0 0.0
    %463 = vmatpush1.msra.mxu0 0.0
    %464 = vmatprep.subr.mxu0 0.0
    %465 = vmatpush1.msra.mxu0 0.0
    %466 = vmatprep.subr.mxu0 0.0
    %467 = vmatpush1.msra.mxu0 0.0
    %468 = vmatprep.subr.mxu0 0.0
    %469 = vmatpush1.msra.mxu0 0.0
    %470 = vmatprep.mubr.f32.mxu0 0.0
    %471 = vmatmul.mubr.f32.gmra.mrb[0].mxu0 %v367
    %v472 = vpop.f32.mrb[0].mxu0
    %v473 = vadd.f32 %v405, %v472
    %v474 = vpop.f32.mrb[0].mxu0
    %475 = vmatprep.mubr.f32.mxu0 0.0
    %476 = vmatmul.mubr.f32.gmra.mrb[0].mxu0 %v368
    %v477 = vpop.f32.mrb[0].mxu0
    %v478 = vadd.f32 %v405, %v477
    %v479 = vpop.f32.mrb[0].mxu0
    %480 = vmatprep.mubr.f32.mxu0 0.0
    %481 = vmatmul.mubr.f32.gmra.mrb[0].mxu0 %v369
    %v482 = vpop.f32.mrb[0].mxu0
    %v483 = vadd.f32 %v405, %v482
    %v484 = vpop.f32.mrb[0].mxu0
    %485 = vmatprep.mubr.f32.mxu0 0.0
    %486 = vmatmul.mubr.f32.gmra.mrb[0].mxu0 %v370
    %v487 = vpop.f32.mrb[0].mxu0
    %v488 = vadd.f32 %v405, %v487
    %v489 = vpop.f32.mrb[0].mxu0
    %490 = vmatprep.mubr.f32.mxu0 0.0
    %491 = vmatmul.mubr.f32.gmra.mrb[0].mxu0 %v371
    %v492 = vpop.f32.mrb[0].mxu0
    %v493 = vadd.f32 %v405, %v492
    %v494 = vpop.f32.mrb[0].mxu0
    %495 = vmatprep.mubr.f32.mxu0 0.0
    %496 = vmatmul.mubr.f32.gmra.mrb[0].mxu0 %v372
    %v497 = vpop.f32.mrb[0].mxu0
    %v498 = vadd.f32 %v405, %v497
    %v499 = vpop.f32.mrb[0].mxu0
    %500 = vmatprep.mubr.f32.mxu0 0.0
    %501 = vmatmul.mubr.f32.gmra.mrb[0].mxu0 %v373
    %v502 = vpop.f32.mrb[0].mxu0
    %v503 = vadd.f32 %v405, %v502
    %v504 = vpop.f32.mrb[0].mxu0
    %505 = vmatprep.mubr.f32.mxu0 0.0
    %506 = vmatmul.mubr.f32.gmra.mrb[0].mxu0 %v374
    %v507 = vpop.f32.mrb[0].mxu0
    %v508 = vadd.f32 %v405, %v507
    %v509 = vpop.f32.mrb[0].mxu0
    %510 = vmatprep.mubr.f32.mxu0 0.0
    %511 = vmatmul.mubr.f32.gmra.mrb[0].mxu0 %v375
    %v512 = vpop.f32.mrb[0].mxu0
    %v513 = vadd.f32 %v405, %v512
    %v514 = vpop.f32.mrb[0].mxu0
    %515 = vmatprep.mubr.f32.mxu0 0.0
    %516 = vmatmul.mubr.f32.gmra.mrb[0].mxu0 %v376
    %v517 = vpop.f32.mrb[0].mxu0
    %v518 = vadd.f32 %v405, %v517
    %v519 = vpop.f32.mrb[0].mxu0
    %520 = vmatprep.mubr.f32.mxu0 0.0
    %521 = vmatmul.mubr.f32.gmra.mrb[0].mxu0 %v377
    %v522 = vpop.f32.mrb[0].mxu0
    %v523 = vadd.f32 %v405, %v522
    %v524 = vpop.f32.mrb[0].mxu0
    %525 = vmatprep.mubr.f32.mxu0 0.0
    %526 = vmatmul.mubr.f32.gmra.mrb[0].mxu0 %v378
    %v527 = vpop.f32.mrb[0].mxu0
    %v528 = vadd.f32 %v405, %v527
    %v529 = vpop.f32.mrb[0].mxu0
    %530 = vmatprep.mubr.f32.mxu0 0.0
    %531 = vmatmul.mubr.f32.gmra.mrb[0].mxu0 %v379
    %v532 = vpop.f32.mrb[0].mxu0
    %v533 = vadd.f32 %v405, %v532
    %v534 = vpop.f32.mrb[0].mxu0
    %535 = vmatprep.mubr.f32.mxu0 0.0
    %536 = vmatmul.mubr.f32.gmra.mrb[0].mxu0 %v380
    %v537 = vpop.f32.mrb[0].mxu0
    %v538 = vadd.f32 %v405, %v537
    %v539 = vpop.f32.mrb[0].mxu0
    %540 = vmatprep.mubr.f32.mxu0 0.0
    %541 = vmatmul.mubr.f32.gmra.mrb[0].mxu0 %v381
    %v542 = vpop.f32.mrb[0].mxu0
    %v543 = vadd.f32 %v405, %v542
    %v544 = vpop.f32.mrb[0].mxu0
    %545 = vmatprep.mubr.f32.mxu0 0.0
    %546 = vmatmul.mubr.f32.gmra.mrb[0].mxu0 %v382
    %v547 = vpop.f32.mrb[0].mxu0
    %v548 = vadd.f32 %v405, %v547
    %v549 = vpop.f32.mrb[0].mxu0
    %550 = vdwg.mxu0
    %v551 = vmax.f32 %v473, 0.0
    %v552 = vmax.f32 %v478, 0.0
    %v553 = vmax.f32 %v483, 0.0
    %v554 = vmax.f32 %v488, 0.0
    %v555 = vmax.f32 %v493, 0.0
    %v556 = vmax.f32 %v498, 0.0
    %v557 = vmax.f32 %v503, 0.0
    %v558 = vmax.f32 %v508, 0.0
    %v559 = vmax.f32 %v513, 0.0
    %v560 = vmax.f32 %v518, 0.0
    %v561 = vmax.f32 %v523, 0.0
    %v562 = vmax.f32 %v528, 0.0
    %v563 = vmax.f32 %v533, 0.0
    %v564 = vmax.f32 %v538, 0.0
    %v565 = vmax.f32 %v543, 0.0
    %v566 = vmax.f32 %v548, 0.0
    %v567 = vadd.f32 %v551, %v552
    %v568 = vadd.f32 %v567, %v553
    %v569 = vadd.f32 %v568, %v554
    %v570 = vadd.f32 %v569, %v555
    %v571 = vadd.f32 %v570, %v556
    %v572 = vadd.f32 %v571, %v557
    %v573 = vadd.f32 %v572, %v558
    %v574 = vadd.f32 %v573, %v559
    %v575 = vadd.f32 %v574, %v560
    %v576 = vadd.f32 %v575, %v561
    %v577 = vadd.f32 %v576, %v562
    %v578 = vadd.f32 %v577, %v563
    %v579 = vadd.f32 %v578, %v564
    %v580 = vadd.f32 %v579, %v565
    %v581 = vadd.f32 %v580, %v566
    %v582 = vrot.slane %v581, 4
    %v583 = vadd.f32 %v581, %v582
    %v584 = vrot.slane %v583, 2
    %v585 = vadd.f32 %v583, %v584
    %v586 = vrot.slane %v585, 1
    %v587 = vadd.f32 %v585, %v586
    %v588 = vmul.f32 %v587, 0.0078125
    %v589 = vmul.f32 %v551, %v551
    %v590 = vmul.f32 %v552, %v552
    %v591 = vmul.f32 %v553, %v553
    %v592 = vmul.f32 %v554, %v554
    %v593 = vmul.f32 %v555, %v555
    %v594 = vmul.f32 %v556, %v556
    %v595 = vmul.f32 %v557, %v557
    %v596 = vmul.f32 %v558, %v558
    %v597 = vmul.f32 %v559, %v559
    %v598 = vmul.f32 %v560, %v560
    %v599 = vmul.f32 %v561, %v561
    %v600 = vmul.f32 %v562, %v562
    %v601 = vmul.f32 %v563, %v563
    %v602 = vmul.f32 %v564, %v564
    %v603 = vmul.f32 %v565, %v565
    %v604 = vmul.f32 %v566, %v566
    %v605 = vadd.f32 %v589, %v590
    %v606 = vadd.f32 %v605, %v591
    %v607 = vadd.f32 %v606, %v592
    %v608 = vadd.f32 %v607, %v593
    %v609 = vadd.f32 %v608, %v594
    %v610 = vadd.f32 %v609, %v595
    %v611 = vadd.f32 %v610, %v596
    %v612 = vadd.f32 %v611, %v597
    %v613 = vadd.f32 %v612, %v598
    %v614 = vadd.f32 %v613, %v599
    %v615 = vadd.f32 %v614, %v600
    %v616 = vadd.f32 %v615, %v601
    %v617 = vadd.f32 %v616, %v602
    %v618 = vadd.f32 %v617, %v603
    %v619 = vadd.f32 %v618, %v604
    %v620 = vrot.slane %v619, 4
    %v621 = vadd.f32 %v619, %v620
    %v622 = vrot.slane %v621, 2
    %v623 = vadd.f32 %v621, %v622
    %v624 = vrot.slane %v623, 1
    %v625 = vadd.f32 %v623, %v624
    %v626 = vmul.f32 %v625, 0.0078125
    %v627 = vmul.f32 %v588, %v588
    %v628 = vsub.f32 %v626, %v627
    %v629 = vmax.f32 %v628, 0.0
    %v630 = vadd.f32 %v629, 1e-05
    %v631 = vrsqrt.pop %v630
    %v632 = vmul.f32 %v384, %v631
    %v633 = vmul.f32 %v588, %v632
    %v634 = vsub.f32 %v385, %v633
    %v635 = vlaneseq
    %v636 = vshrl.u32 %v635, 7
    %v637 = vsub.s32 0, %v636
    %v638 = vrot.slane %v632, %v637
    %v639 = vmul.f32 %v551, %v638
    %v640 = vmul.f32 %v552, %v638
    %v641 = vmul.f32 %v553, %v638
    %v642 = vmul.f32 %v554, %v638
    %v643 = vmul.f32 %v555, %v638
    %v644 = vmul.f32 %v556, %v638
    %v645 = vmul.f32 %v557, %v638
    %v646 = vmul.f32 %v558, %v638
    %v647 = vmul.f32 %v559, %v638
    %v648 = vmul.f32 %v560, %v638
    %v649 = vmul.f32 %v561, %v638
    %v650 = vmul.f32 %v562, %v638
    %v651 = vmul.f32 %v563, %v638
    %v652 = vmul.f32 %v564, %v638
    %v653 = vmul.f32 %v565, %v638
    %v654 = vmul.f32 %v566, %v638
    %v655 = vlaneseq
    %v656 = vshrl.u32 %v655, 7
    %v657 = vsub.s32 0, %v656
    %v658 = vrot.slane %v634, %v657
    %v659 = vadd.f32 %v639, %v658
    %v660 = vadd.f32 %v640, %v658
    %v661 = vadd.f32 %v641, %v658
    %v662 = vadd.f32 %v642, %v658
    %v663 = vadd.f32 %v643, %v658
    %v664 = vadd.f32 %v644, %v658
    %v665 = vadd.f32 %v645, %v658
    %v666 = vadd.f32 %v646, %v658
    %v667 = vadd.f32 %v647, %v658
    %v668 = vadd.f32 %v648, %v658
    %v669 = vadd.f32 %v649, %v658
    %v670 = vadd.f32 %v650, %v658
    %v671 = vadd.f32 %v651, %v658
    %v672 = vadd.f32 %v652, %v658
    %v673 = vadd.f32 %v653, %v658
    %v674 = vadd.f32 %v654, %v658
    %v675 = vld [vmem:[#allocation2] sm:$0xff]
    %v676 = vld [vmem:[#allocation2 + $0x8] sm:$0xff]
    %v677 = vld [vmem:[#allocation2 + $0x10] sm:$0xff]
    %v678 = vld [vmem:[#allocation2 + $0x18] sm:$0xff]
    %v679 = vld [vmem:[#allocation2 + $0x20] sm:$0xff]
    %v680 = vld [vmem:[#allocation2 + $0x28] sm:$0xff]
    %v681 = vld [vmem:[#allocation2 + $0x30] sm:$0xff]
    %v682 = vld [vmem:[#allocation2 + $0x38] sm:$0xff]
    %v683 = vld [vmem:[#allocation2 + $0x40] sm:$0xff]
    %v684 = vld [vmem:[#allocation2 + $0x48] sm:$0xff]
    %v685 = vld [vmem:[#allocation2 + $0x50] sm:$0xff]
    %v686 = vld [vmem:[#allocation2 + $0x58] sm:$0xff]
    %v687 = vld [vmem:[#allocation2 + $0x60] sm:$0xff]
    %v688 = vld [vmem:[#allocation2 + $0x68] sm:$0xff]
    %v689 = vld [vmem:[#allocation2 + $0x70] sm:$0xff]
    %v690 = vld [vmem:[#allocation2 + $0x78] sm:$0xff]
    %v691 = vld [vmem:[%s6] sm:$0x1]
    %v693 = vlaneseq
    %v694 = vshrl.u32 %v693, 7
    %v695 = vsub.s32 0, %v694
    %v696 = vrot.slane %v691, %v695
    %698 = vmatprep.subr.mxu0 0.0
    %699 = vmatpush1.msra.mxu0 %v675
    %700 = vmatprep.subr.mxu0 0.0
    %701 = vmatpush1.msra.mxu0 %v676
    %702 = vmatprep.subr.mxu0 0.0
    %703 = vmatpush1.msra.mxu0 %v677
    %704 = vmatprep.subr.mxu0 0.0
    %705 = vmatpush1.msra.mxu0 %v678
    %706 = vmatprep.subr.mxu0 0.0
    %707 = vmatpush1.msra.mxu0 %v679
    %708 = vmatprep.subr.mxu0 0.0
    %709 = vmatpush1.msra.mxu0 %v680
    %710 = vmatprep.subr.mxu0 0.0
    %711 = vmatpush1.msra.mxu0 %v681
    %712 = vmatprep.subr.mxu0 0.0
    %713 = vmatpush1.msra.mxu0 %v682
    %714 = vmatprep.subr.mxu0 0.0
    %715 = vmatpush1.msra.mxu0 %v683
    %716 = vmatprep.subr.mxu0 0.0
    %717 = vmatpush1.msra.mxu0 %v684
    %718 = vmatprep.subr.mxu0 0.0
    %719 = vmatpush1.msra.mxu0 %v685
    %720 = vmatprep.subr.mxu0 0.0
    %721 = vmatpush1.msra.mxu0 %v686
    %722 = vmatprep.subr.mxu0 0.0
    %723 = vmatpush1.msra.mxu0 %v687
    %724 = vmatprep.subr.mxu0 0.0
    %725 = vmatpush1.msra.mxu0 %v688
    %726 = vmatprep.subr.mxu0 0.0
    %727 = vmatpush1.msra.mxu0 %v689
    %728 = vmatprep.subr.mxu0 0.0
    %729 = vmatpush1.msra.mxu0 %v690
    %730 = vmatprep.subr.mxu0 0.0
    %731 = vmatpush1.msra.mxu0 0.0
    %732 = vmatprep.subr.mxu0 0.0
    %733 = vmatpush1.msra.mxu0 0.0
    %734 = vmatprep.subr.mxu0 0.0
    %735 = vmatpush1.msra.mxu0 0.0
    %736 = vmatprep.subr.mxu0 0.0
    %737 = vmatpush1.msra.mxu0 0.0
    %738 = vmatprep.subr.mxu0 0.0
    %739 = vmatpush1.msra.mxu0 0.0
    %740 = vmatprep.subr.mxu0 0.0
    %741 = vmatpush1.msra.mxu0 0.0
    %742 = vmatprep.subr.mxu0 0.0
    %743 = vmatpush1.msra.mxu0 0.0
    %744 = vmatprep.subr.mxu0 0.0
    %745 = vmatpush1.msra.mxu0 0.0
    %746 = vmatprep.subr.mxu0 0.0
    %747 = vmatpush1.msra.mxu0 0.0
    %748 = vmatprep.subr.mxu0 0.0
    %749 = vmatpush1.msra.mxu0 0.0
    %750 = vmatprep.subr.mxu0 0.0
    %751 = vmatpush1.msra.mxu0 0.0
    %752 = vmatprep.subr.mxu0 0.0
    %753 = vmatpush1.msra.mxu0 0.0
    %754 = vmatprep.subr.mxu0 0.0
    %755 = vmatpush1.msra.mxu0 0.0
    %756 = vmatprep.subr.mxu0 0.0
    %757 = vmatpush1.msra.mxu0 0.0
    %758 = vmatprep.subr.mxu0 0.0
    %759 = vmatpush1.msra.mxu0 0.0
    %760 = vmatprep.subr.mxu0 0.0
    %761 = vmatpush1.msra.mxu0 0.0
    %762 = vmatprep.mubr.f32.mxu0 0.0
    %763 = vmatmul.mubr.f32.gmra.mrb[0].mxu0 %v659
    %v764 = vpop.f32.mrb[0].mxu0
    %v765 = vadd.f32 %v696, %v764
    %v766 = vpop.f32.mrb[0].mxu0
    %767 = vmatprep.mubr.f32.mxu0 0.0
    %768 = vmatmul.mubr.f32.gmra.mrb[0].mxu0 %v660
    %v769 = vpop.f32.mrb[0].mxu0
    %v770 = vadd.f32 %v696, %v769
    %v771 = vpop.f32.mrb[0].mxu0
    %772 = vmatprep.mubr.f32.mxu0 0.0
    %773 = vmatmul.mubr.f32.gmra.mrb[0].mxu0 %v661
    %v774 = vpop.f32.mrb[0].mxu0
    %v775 = vadd.f32 %v696, %v774
    %v776 = vpop.f32.mrb[0].mxu0
    %777 = vmatprep.mubr.f32.mxu0 0.0
    %778 = vmatmul.mubr.f32.gmra.mrb[0].mxu0 %v662
    %v779 = vpop.f32.mrb[0].mxu0
    %v780 = vadd.f32 %v696, %v779
    %v781 = vpop.f32.mrb[0].mxu0
    %782 = vmatprep.mubr.f32.mxu0 0.0
    %783 = vmatmul.mubr.f32.gmra.mrb[0].mxu0 %v663
    %v784 = vpop.f32.mrb[0].mxu0
    %v785 = vadd.f32 %v696, %v784
    %v786 = vpop.f32.mrb[0].mxu0
    %787 = vmatprep.mubr.f32.mxu0 0.0
    %788 = vmatmul.mubr.f32.gmra.mrb[0].mxu0 %v664
    %v789 = vpop.f32.mrb[0].mxu0
    %v790 = vadd.f32 %v696, %v789
    %v791 = vpop.f32.mrb[0].mxu0
    %792 = vmatprep.mubr.f32.mxu0 0.0
    %793 = vmatmul.mubr.f32.gmra.mrb[0].mxu0 %v665
    %v794 = vpop.f32.mrb[0].mxu0
    %v795 = vadd.f32 %v696, %v794
    %v796 = vpop.f32.mrb[0].mxu0
    %797 = vmatprep.mubr.f32.mxu0 0.0
    %798 = vmatmul.mubr.f32.gmra.mrb[0].mxu0 %v666
    %v799 = vpop.f32.mrb[0].mxu0
    %v800 = vadd.f32 %v696, %v799
    %v801 = vpop.f32.mrb[0].mxu0
    %802 = vmatprep.mubr.f32.mxu0 0.0
    %803 = vmatmul.mubr.f32.gmra.mrb[0].mxu0 %v667
    %v804 = vpop.f32.mrb[0].mxu0
    %v805 = vadd.f32 %v696, %v804
    %v806 = vpop.f32.mrb[0].mxu0
    %807 = vmatprep.mubr.f32.mxu0 0.0
    %808 = vmatmul.mubr.f32.gmra.mrb[0].mxu0 %v668
    %v809 = vpop.f32.mrb[0].mxu0
    %v810 = vadd.f32 %v696, %v809
    %v811 = vpop.f32.mrb[0].mxu0
    %812 = vmatprep.mubr.f32.mxu0 0.0
    %813 = vmatmul.mubr.f32.gmra.mrb[0].mxu0 %v669
    %v814 = vpop.f32.mrb[0].mxu0
    %v815 = vadd.f32 %v696, %v814
    %v816 = vpop.f32.mrb[0].mxu0
    %817 = vmatprep.mubr.f32.mxu0 0.0
    %818 = vmatmul.mubr.f32.gmra.mrb[0].mxu0 %v670
    %v819 = vpop.f32.mrb[0].mxu0
    %v820 = vadd.f32 %v696, %v819
    %v821 = vpop.f32.mrb[0].mxu0
    %822 = vmatprep.mubr.f32.mxu0 0.0
    %823 = vmatmul.mubr.f32.gmra.mrb[0].mxu0 %v671
    %v824 = vpop.f32.mrb[0].mxu0
    %v825 = vadd.f32 %v696, %v824
    %v826 = vpop.f32.mrb[0].mxu0
    %827 = vmatprep.mubr.f32.mxu0 0.0
    %828 = vmatmul.mubr.f32.gmra.mrb[0].mxu0 %v672
    %v829 = vpop.f32.mrb[0].mxu0
    %v830 = vadd.f32 %v696, %v829
    %v831 = vpop.f32.mrb[0].mxu0
    %832 = vmatprep.mubr.f32.mxu0 0.0
    %833 = vmatmul.mubr.f32.gmra.mrb[0].mxu0 %v673
    %v834 = vpop.f32.mrb[0].mxu0
    %v835 = vadd.f32 %v696, %v834
    %v836 = vpop.f32.mrb[0].mxu0
    %837 = vmatprep.mubr.f32.mxu0 0.0
    %838 = vmatmul.mubr.f32.gmra.mrb[0].mxu0 %v674
    %v839 = vpop.f32.mrb[0].mxu0
    %v840 = vadd.f32 %v696, %v839
    %v841 = vpop.f32.mrb[0].mxu0
    %842 = vdwg.mxu0
    %v843 = vtanh.pop %v765
    %v844 = vtanh.pop %v770
    %v845 = vtanh.pop %v775
    %v846 = vtanh.pop %v780
    %v847 = vtanh.pop %v785
    %v848 = vtanh.pop %v790
    %v849 = vtanh.pop %v795
    %v850 = vtanh.pop %v800
    %v851 = vtanh.pop %v805
    %v852 = vtanh.pop %v810
    %v853 = vtanh.pop %v815
    %v854 = vtanh.pop %v820
    %v855 = vtanh.pop %v825
    %v856 = vtanh.pop %v830
    %v857 = vtanh.pop %v835
    %v858 = vtanh.pop %v840
    %859 = vst [vmem:[%s7] sm:$0xff] %v843
    %860 = vst [vmem:[%s7 + $0x8] sm:$0xff] %v844
    %861 = vst [vmem:[%s7 + $0x10] sm:$0xff] %v845
    %862 = vst [vmem:[%s7 + $0x18] sm:$0xff] %v846
    %863 = vst [vmem:[%s7 + $0x20] sm:$0xff] %v847
    %864 = vst [vmem:[%s7 + $0x28] sm:$0xff] %v848
    %865 = vst [vmem:[%s7 + $0x30] sm:$0xff] %v849
    %866 = vst [vmem:[%s7 + $0x38] sm:$0xff] %v850
    %867 = vst [vmem:[%s7 + $0x40] sm:$0xff] %v851
    %868 = vst [vmem:[%s7 + $0x48] sm:$0xff] %v852
    %869 = vst [vmem:[%s7 + $0x50] sm:$0xff] %v853
    %870 = vst [vmem:[%s7 + $0x58] sm:$0xff] %v854
    %871 = vst [vmem:[%s7 + $0x60] sm:$0xff] %v855
    %872 = vst [vmem:[%s7 + $0x68] sm:$0xff] %v856
    %873 = vst [vmem:[%s7 + $0x70] sm:$0xff] %v857
    %874 = vst [vmem:[%s7 + $0x78] sm:$0xff] %v858
    // Predicated region
    $region34: #{actor_forward.1} parent=1 // pred_check
      _
    $region35: #{actor_forward.1} parent=1 // pred_check_branch
      %876 = sbr.rel (0) target = $region37
    $region36: #{actor_forward.1} parent=1 // pred_region
      _
    $region37: #{actor_forward.1} parent=1 // pred_fallthru
      _
    // Predicated region
    $region38: #{actor_forward.1} parent=1 // pred_check
      _
    $region39: #{actor_forward.1} parent=1 // pred_check_branch
      %878 = sbr.rel (0) target = $region41
    $region40: #{actor_forward.1} parent=1 // pred_region
      _
    $region41: #{actor_forward.1} parent=1 // pred_fallthru
      _
    %879 = vsyncpa [#allocation3], 1

</llo_original>
